<compile_context>
chip_gen: v7x
topology: tpu7x:2x2x1
jax: 0.10.0
libtpu: 0.0.40
codegen_flags: <defaults>
</compile_context>

<pallas_src>
import functools

import jax
import jax.numpy as jnp
from jax import lax
from jax.experimental import pallas as pl
from jax.experimental.pallas import tpu as pltpu

LANES = 128
SUBLANES = 8


def _tpu_defaults():
    """Return (num_tensorcores, target bytes per input block) for the local TPU."""
    kind = ""
    try:
        kind = jax.devices()[0].device_kind.lower()
    except Exception:
        pass
    if "v7" in kind or "tpu7" in kind or "7x" in kind:
        # v7x: 2 TCs/chip, 64 MiB physical VMEM, ~3.2 TB/s HBM per TC.
        return 2, 4 << 20
    if "v6" in kind:
        # v6e: 1 TC, 32 MiB default scoped VMEM -> 4 MiB blocks amortize the
        # ~0.35 us/step grid overhead.
        return 1, 4 << 20
    # v5e (16 MiB default scoped VMEM) and anything unknown: stay conservative.
    return 1, 2 << 20


def _mse_sum_kernel(s_ref, t_ref, o_ref, acc_ref, *, rows, tile, steps,
                    acc_rows, needs_mask, partial_start):
    """Accumulate sum((s - t)^2) for one core's share of row tiles."""
    c = pl.program_id(0)   # core axis (CORE_PARALLEL on v7x, size 1 elsewhere)
    i = pl.program_id(1)   # row-tile reduction axis ("arbitrary")

    @pl.when(i == 0)
    def _init():
        acc_ref[...] = jnp.zeros_like(acc_ref)

    d = s_ref[...].astype(jnp.float32) - t_ref[...].astype(jnp.float32)
    sq = d * d

    def _accumulate(x):
        # Reduce the (tile, 128) block only down to an (acc_rows, 128) VMEM
        # accumulator: up to 8 independent per-vreg add chains, no per-step
        # cross-lane reduce.
        acc_ref[...] += jnp.sum(x.reshape(tile // acc_rows, acc_rows, LANES),
                                axis=0)

    if needs_mask:
        tile_idx = c * steps + i

        @pl.when(tile_idx < partial_start)
        def _full_tile():
            _accumulate(sq)

        @pl.when(tile_idx >= partial_start)
        def _tail_tile():
            # Ragged / phantom tail tile: drop rows past `rows`.  The select is
            # applied AFTER squaring so unspecified (NaN/Inf) garbage past the
            # array end never propagates.
            row_ids = lax.broadcasted_iota(jnp.int32, (tile, LANES), 0)
            valid = (tile_idx * tile + row_ids) < rows
            _accumulate(jnp.where(valid, sq, 0.0))
    else:
        _accumulate(sq)

    @pl.when(i == steps - 1)
    def _finalize():
        o_ref[0, 0] = jnp.sum(acc_ref[...])


@functools.partial(jax.jit, static_argnames=("tile_rows", "num_cores"))
def hint_loss(student_hint, teacher_hint, tile_rows=None, num_cores=None):
    """MSE loss (mean over all elements), matching nn.MSELoss() in HintLoss."""
    assert student_hint.shape == teacher_hint.shape
    n_elems = student_hint.size
    if n_elems == 0:
        return jnp.float32(0.0)

    dtype = student_hint.dtype
    itemsize = jnp.dtype(dtype).itemsize
    # Packed sublane multiple: 8 for f32, 16 for bf16, 32 for int8/fp8.
    sublane_mult = SUBLANES * max(1, 4 // itemsize)

    det_cores, target_block_bytes = _tpu_defaults()
    if num_cores is None:
        num_cores = det_cores
    if tile_rows is None:
        # Keep DMA bytes per step constant regardless of dtype width.
        tile_rows = target_block_bytes // (LANES * itemsize)
    tile_rows = max(sublane_mult, (tile_rows // sublane_mult) * sublane_mult)

    s_flat = student_hint.reshape(-1)
    t_flat = teacher_hint.reshape(-1)

    # Kernel runs over the aligned prefix; the (< align)-element remainder is
    # added with a tiny jnp expression.  No full-size padded copy is made.
    align = sublane_mult * LANES
    n_main = (n_elems // align) * align
    rem = n_elems - n_main

    tail_sum = jnp.float32(0.0)
    if rem:
        ts = lax.slice(s_flat, (n_main,), (n_elems,)).astype(jnp.float32)
        tt = lax.slice(t_flat, (n_main,), (n_elems,)).astype(jnp.float32)
        tail_sum = jnp.sum((ts - tt) ** 2)

    if n_main == 0:
        # Input smaller than one aligned row group: pure jnp fallback.
        return (tail_sum / jnp.float32(n_elems)).astype(jnp.float32)

    if rem:
        # TODO(synk): XLA may still copy this prefix slice for very unaligned
        # inputs; typical hint feature maps hit the aligned (zero-copy) path.
        s_flat = lax.slice(s_flat, (0,), (n_main,))
        t_flat = lax.slice(t_flat, (0,), (n_main,))

    rows = n_main // LANES               # multiple of sublane_mult
    s2d = s_flat.reshape(rows, LANES)    # lane-dense view, free reshape
    t2d = t_flat.reshape(rows, LANES)

    tile = min(tile_rows, rows)          # both multiples of sublane_mult
    total_tiles = pl.cdiv(rows, tile)
    cores = max(1, min(num_cores, total_tiles))
    steps = pl.cdiv(total_tiles, cores)
    last_tile = total_tiles - 1
    needs_mask = cores * steps * tile != rows
    partial_start = rows // tile         # first tile index that over-covers

    # Widest accumulator (<=64 rows) that divides the tile: independent add
    # chains per vreg hide VALU latency; fallback 8 always divides.
    acc_rows = SUBLANES
    for cand in (64, 32, 16):
        if tile % cand == 0:
            acc_rows = cand
            break

    # Explicit VMEM budget: 2 inputs x 2 pipeline buffers x block + headroom.
    block_bytes = tile * LANES * itemsize
    vmem_limit = int(max(16 << 20, 4 * block_bytes + (4 << 20)))

    def in_map(c, i):
        # Clamp so phantom tail tiles re-read a valid block (masked to 0 above).
        return (jnp.minimum(c * steps + i, last_tile), 0)

    kernel = functools.partial(
        _mse_sum_kernel, rows=rows, tile=tile, steps=steps, acc_rows=acc_rows,
        needs_mask=needs_mask, partial_start=partial_start)

    # True 2-TensorCore sharding on v7x; plain serial loop elsewhere.
    dim_sem = ((pltpu.CORE_PARALLEL, pltpu.ARBITRARY) if cores > 1
               else (pltpu.ARBITRARY, pltpu.ARBITRARY))

    partials = pl.pallas_call(
        kernel,
        out_shape=jax.ShapeDtypeStruct((cores, 1), jnp.float32),
        grid_spec=pltpu.PrefetchScalarGridSpec(
            num_scalar_prefetch=0,
            grid=(cores, steps),
            in_specs=[
                pl.BlockSpec((tile, LANES), in_map),
                pl.BlockSpec((tile, LANES), in_map),
            ],
            out_specs=pl.BlockSpec(
                (1, 1), lambda c, i: (c, 0), memory_space=pltpu.SMEM
            ),
            scratch_shapes=[pltpu.VMEM((acc_rows, LANES), jnp.float32)],
        ),
        compiler_params=pltpu.CompilerParams(
            dimension_semantics=dim_sem,
            vmem_limit_bytes=vmem_limit,
        ),
    )(s2d, t2d)

    # nn.MSELoss default reduction='mean': divide by the ORIGINAL element count.
    return ((jnp.sum(partials) + tail_sum)
            / jnp.float32(n_elems)).astype(jnp.float32)


if __name__ == "__main__":
    key = jax.random.PRNGKey(0)
    k1, k2, k3, k4, k5, k6 = jax.random.split(key, 6)

    # 1) Typical aligned NCHW hint pair, generation-aware defaults.
    student_hint = jax.random.normal(k1, (2, 4, 16, 16), dtype=jnp.float32)
    teacher_hint = jax.random.normal(k2, (2, 4, 16, 16), dtype=jnp.float32)
    loss = hint_loss(student_hint, teacher_hint)
    jax.block_until_ready(loss)
    ref = jnp.mean((student_hint - teacher_hint) ** 2)
    assert jnp.allclose(loss, ref, rtol=1e-5, atol=1e-6), (loss, ref)

    # 2) Unaligned element count (3*5*17*19 = 4845): aligned prefix through the
    #    kernel + tiny jnp tail; small tile exercises the multi-step reduction.
    s2 = jax.random.normal(k3, (3, 5, 17, 19), dtype=jnp.float32)
    t2 = jax.random.normal(k4, (3, 5, 17, 19), dtype=jnp.float32)
    loss2 = hint_loss(s2, t2, tile_rows=8)
    jax.block_until_ready(loss2)
    ref2 = jnp.mean((s2 - t2) ** 2)
    assert jnp.allclose(loss2, ref2, rtol=1e-5, atol=1e-6), (loss2, ref2)

    # 3) bf16 inputs with a ragged last tile (rows=48, tile=32): exercises the
    #    dtype-aware sublane alignment and the pl.when-gated mask path.
    s3 = jax.random.normal(k5, (3, 16, 128), dtype=jnp.bfloat16)
    t3 = jax.random.normal(k6, (3, 16, 128), dtype=jnp.bfloat16)
    loss3 = hint_loss(s3, t3, tile_rows=32)
    jax.block_until_ready(loss3)
    ref3 = jnp.mean((s3.astype(jnp.float32) - t3.astype(jnp.float32)) ** 2)
    assert jnp.allclose(loss3, ref3, rtol=1e-5, atol=1e-6), (loss3, ref3)

    print("KERNEL_OK")
</pallas_src>

<mosaic_0001>
module attributes {stable_mosaic.version = 11 : i64} {
  func.func @_mse_sum_kernel(%arg0: i32, %arg1: i32, %arg2: memref<16x128xf32, #tpu.memory_space<vmem>>, %arg3: memref<16x128xf32, #tpu.memory_space<vmem>>, %arg4: memref<1x1xf32, #tpu.memory_space<smem>>, %arg5: memref<16x128xf32, #tpu.memory_space<vmem>>) attributes {dimension_semantics = [#tpu.dimension_semantics<arbitrary>, #tpu.dimension_semantics<arbitrary>], iteration_bounds = array<i64: 1, 1>, scalar_prefetch = 0 : i64, scratch_operands = 1 : i64, tpu.core_type = #tpu.core_type<tc>, window_params = [{transform_indices = @transform_0, window_bounds = array<i64: 16, 128>}, {transform_indices = @transform_1, window_bounds = array<i64: 16, 128>}, {transform_indices = @transform_2, window_bounds = array<i64: 1, 1>}]} {
    %c0_i32 = arith.constant 0 : i32
    %0 = arith.cmpi eq, %arg1, %c0_i32 : i32
    %1 = arith.extui %0 : i1 to i32
    %c0_i32_0 = arith.constant 0 : i32
    %2 = arith.cmpi ne, %1, %c0_i32_0 : i32
    scf.if %2 {
      %cst_10 = arith.constant 0.000000e+00 : f32
      %15 = vector.broadcast %cst_10 : f32 to vector<16x128xf32>
      %c0_11 = arith.constant 0 : index
      %c0_12 = arith.constant 0 : index
      %16 = vector.load %arg5[%c0_11, %c0_12] : memref<16x128xf32, #tpu.memory_space<vmem>>, vector<16x128xf32>
      tpu.vector_store %arg5[%c0_11, %c0_12], %15 {strides = array<i32>} : memref<16x128xf32, #tpu.memory_space<vmem>>, vector<16x128xf32>,
    } else {
    }
    %c0 = arith.constant 0 : index
    %c0_1 = arith.constant 0 : index
    %3 = vector.load %arg2[%c0, %c0_1] : memref<16x128xf32, #tpu.memory_space<vmem>>, vector<16x128xf32>
    %c0_2 = arith.constant 0 : index
    %c0_3 = arith.constant 0 : index
    %4 = vector.load %arg3[%c0_2, %c0_3] : memref<16x128xf32, #tpu.memory_space<vmem>>, vector<16x128xf32>
    %5 = arith.subf %3, %4 : vector<16x128xf32>
    %6 = arith.mulf %5, %5 : vector<16x128xf32>
    %c0_4 = arith.constant 0 : index
    %c0_5 = arith.constant 0 : index
    %7 = vector.load %arg5[%c0_4, %c0_5] : memref<16x128xf32, #tpu.memory_space<vmem>>, vector<16x128xf32>
    %8 = vector.shape_cast %6 : vector<16x128xf32> to vector<1x16x128xf32>
    %cst = arith.constant dense<0.000000e+00> : vector<16x128xf32>
    %9 = vector.multi_reduction <add>, %8, %cst [0] : vector<1x16x128xf32> to vector<16x128xf32>
    %10 = arith.addf %7, %9 : vector<16x128xf32>
    %c0_6 = arith.constant 0 : index
    %c0_7 = arith.constant 0 : index
    %11 = vector.load %arg5[%c0_6, %c0_7] : memref<16x128xf32, #tpu.memory_space<vmem>>, vector<16x128xf32>
    tpu.vector_store %arg5[%c0_6, %c0_7], %10 {strides = array<i32>} : memref<16x128xf32, #tpu.memory_space<vmem>>, vector<16x128xf32>,
    %c0_i32_8 = arith.constant 0 : i32
    %12 = arith.cmpi eq, %arg1, %c0_i32_8 : i32
    %13 = arith.extui %12 : i1 to i32
    %c0_i32_9 = arith.constant 0 : i32
    %14 = arith.cmpi ne, %13, %c0_i32_9 : i32
    scf.if %14 {
      %c0_10 = arith.constant 0 : index
      %c0_11 = arith.constant 0 : index
      %15 = vector.load %arg5[%c0_10, %c0_11] : memref<16x128xf32, #tpu.memory_space<vmem>>, vector<16x128xf32>
      %16 = vector.shape_cast %15 : vector<16x128xf32> to vector<1x16x128xf32>
      %cst_12 = arith.constant dense<0.000000e+00> : vector<1xf32>
      %17 = vector.multi_reduction <add>, %16, %cst_12 [1, 2] : vector<1x16x128xf32> to vector<1xf32>
      %18 = vector.shape_cast %17 : vector<1xf32> to vector<1x1x1xf32>
      %19 = vector.extract %18[0, 0, 0] : f32 from vector<1x1x1xf32>
      %c0_13 = arith.constant 0 : index
      %c0_14 = arith.constant 0 : index
      %20 = memref.load %arg4[%c0_13, %c0_14] : memref<1x1xf32, #tpu.memory_space<smem>>
      memref.store %19, %arg4[%c0_13, %c0_14] : memref<1x1xf32, #tpu.memory_space<smem>>
    } else {
    }
    return
  }
  func.func @transform_0(%arg0: i32, %arg1: i32) -> (i32, i32) {
    %c1_i32 = arith.constant 1 : i32
    %0 = arith.muli %arg0, %c1_i32 : i32
    %1 = arith.addi %0, %arg1 : i32
    %c0_i32 = arith.constant 0 : i32
    %2 = arith.minsi %1, %c0_i32 : i32
    %c0_i32_0 = arith.constant 0 : i32
    %c0_i32_1 = arith.constant 0 : i32
    return %2, %c0_i32_0 : i32, i32
  }
  func.func @transform_1(%arg0: i32, %arg1: i32) -> (i32, i32) {
    %c1_i32 = arith.constant 1 : i32
    %0 = arith.muli %arg0, %c1_i32 : i32
    %1 = arith.addi %0, %arg1 : i32
    %c0_i32 = arith.constant 0 : i32
    %2 = arith.minsi %1, %c0_i32 : i32
    %c0_i32_0 = arith.constant 0 : i32
    %c0_i32_1 = arith.constant 0 : i32
    return %2, %c0_i32_0 : i32, i32
  }
  func.func @transform_2(%arg0: i32, %arg1: i32) -> (i32, i32) {
    %c0_i32 = arith.constant 0 : i32
    %c0_i32_0 = arith.constant 0 : i32
    return %arg0, %c0_i32 : i32, i32
  }
}

</mosaic_0001>

<llo_original>
// kernel: hint_loss.1
$region0: #{hint_loss.1}
  #allocation0 [shape = 'u32[]', space=smem, size = 0x4, offset = 0x4, fixed_abs, tag = 'smem constant byte address 0x4 - core index']
  #allocation1 [shape = 'u32[144,128]{1,0:T(1,128)}', space=vmem, size = 0x12000, scoped, tag = 'internal scratch']
  #allocation2 [shape = 'f32[16,128]{1,0:T(8,128)}', space=vmem, size = 0x2000, scoped, tag = 'scratch operand']
  %s0 = inlined_call_operand.vmem [shape: f32[16,128], index: 0, kind: input, shape index: {}]
  %s1 = inlined_call_operand.vmem [shape: f32[16,128], index: 1, kind: input, shape index: {}]
  %s2 = inlined_call_operand.hbm [shape: f32[1,1], index: 2, kind: output, shape index: {}]
  %s3 = sld [smem:[#allocation0]]
  $region26: #{hint_loss.1} parent=0
    _
  %s5 = ssub.s32 1, %s3
  %s6 = scalar_select 0, %s5, %s3
  $region1: #{hint_loss.1} parent=0
    #allocation3 [shape = 'u8[512]{0}', space=smem, size = 0x200, scoped, tag = 'output window, operand 0, single buffered']
    #allocation4 [shape = 's32[1]{0}', space=sflag, size = 0x4, scoped, tag = 'scoped memory for hint_loss.1']
    %7 = vsyncpa [#allocation4], 0
    // Predicated region
    $region2: #{hint_loss.1} parent=1 // pred_check
      _
    $region3: #{hint_loss.1} parent=1 // pred_check_branch
      %9 = sbr.rel (0) target = $region5
    $region4: #{hint_loss.1} parent=1 // pred_region
      %s10 = sadd.s32 0, 0
      %p11 = scmp.lt.s32.totalorder %s10, 0
      %s12 = scalar_select %p11, %s10, 0
      %s13 = smul.u32 2, %s12
      %p14 = scmp.lt.s32.totalorder %s13, 1
      %s15 = scalar_select %p14, %s13, 1
      %s16 = smul.addr %s15, 8
      %s17 = scalar_lea.vmem %s0, %s16
      %s18 = sadd.s32 0, 0
      %p19 = scmp.lt.s32.totalorder %s18, 0
      %s20 = scalar_select %p19, %s18, 0
      %s21 = smul.u32 2, %s20
    $region5: #{hint_loss.1} parent=1 // pred_fallthru
      _
    // Predicated region
    $region6: #{hint_loss.1} parent=1 // pred_check
      _
    $region7: #{hint_loss.1} parent=1 // pred_check_branch
      %23 = sbr.rel (0) target = $region9
    $region8: #{hint_loss.1} parent=1 // pred_region
      %s24 = sadd.s32 0, 0
      %p25 = scmp.lt.s32.totalorder %s24, 0
      %s26 = scalar_select %p25, %s24, 0
      %s27 = smul.u32 2, %s26
      %p28 = scmp.lt.s32.totalorder %s27, 1
      %s29 = scalar_select %p28, %s27, 1
      %s30 = smul.addr %s29, 8
      %s31 = scalar_lea.vmem %s1, %s30
      %s32 = sadd.s32 0, 0
      %p33 = scmp.lt.s32.totalorder %s32, 0
      %s34 = scalar_select %p33, %s32, 0
      %s35 = smul.u32 2, %s34
    $region9: #{hint_loss.1} parent=1 // pred_fallthru
      _
    %s36 = sadd.s32 0, 0
    %p37 = scmp.lt.s32.totalorder %s36, 0
    %s38 = scalar_select %p37, %s36, 0
    %s39 = smul.u32 2, %s38
    %p40 = scmp.lt.s32.totalorder %s39, 1
    %s41 = scalar_select %p40, %s39, 1
    %s42 = smul.addr %s41, 8
    %s43 = scalar_lea.vmem %s0, %s42
    %s44 = sadd.s32 0, 0
    %p45 = scmp.lt.s32.totalorder %s44, 0
    %s46 = scalar_select %p45, %s44, 0
    %s47 = smul.u32 2, %s46
    %p48 = scmp.lt.s32.totalorder %s47, 1
    %s49 = scalar_select %p48, %s47, 1
    %s50 = smul.addr %s49, 8
    %s51 = scalar_lea.vmem %s1, %s50
    %s52 = sadd.s32 0, 0
    %p53 = scmp.lt.s32.totalorder %s52, 0
    %s54 = scalar_select %p53, %s52, 0
    %s55 = smul.u32 2, %s54
    %p56 = scmp.lt.s32.totalorder %s55, 1
    %s57 = scalar_select %p56, %s55, 1
    %s58 = smul.addr %s57, 8
    %s59 = scalar_lea.vmem %s0, %s58
    %s60 = sadd.s32 0, 0
    %p61 = scmp.lt.s32.totalorder %s60, 0
    %s62 = scalar_select %p61, %s60, 0
    %s63 = smul.u32 2, %s62
    %s64 = sadd.s32 0, 0
    %p65 = scmp.lt.s32.totalorder %s64, 0
    %s66 = scalar_select %p65, %s64, 0
    %s67 = smul.u32 2, %s66
    %p68 = scmp.lt.s32.totalorder %s67, 1
    %s69 = scalar_select %p68, %s67, 1
    %s70 = smul.addr %s69, 8
    %s71 = scalar_lea.vmem %s1, %s70
    %s72 = sadd.s32 0, 0
    %p73 = scmp.lt.s32.totalorder %s72, 0
    %s74 = scalar_select %p73, %s72, 0
    %s75 = smul.u32 2, %s74
    %p76 = scmp.eq.s32.totalorder 0, 0
    // Predicated region
    $region10: #{hint_loss.1} parent=1 // pred_check
      %p77 = pneg %p76
    $region11: #{hint_loss.1} parent=1 // pred_check_branch
      %79 = sbr.rel (%p77) target = $region13
    $region12: #{hint_loss.1} parent=1 // pred_region
      %80 = vst [vmem:[#allocation2] sm:$0xff] 0.0
      %81 = vst [vmem:[#allocation2 + $0x8] sm:$0xff] 0.0
    $region13: #{hint_loss.1} parent=1 // pred_fallthru
      _
    %v82 = vld [vmem:[%s59] sm:$0xff]
    %v83 = vld [vmem:[%s59 + $0x8] sm:$0xff]
    %v84 = vld [vmem:[%s71] sm:$0xff]
    %v85 = vld [vmem:[%s71 + $0x8] sm:$0xff]
    %v86 = vsub.f32 %v82, %v84
    %v87 = vsub.f32 %v83, %v85
    %v88 = vmul.f32 %v86, %v86
    %v89 = vmul.f32 %v87, %v87
    %v90 = vld [vmem:[#allocation2] sm:$0xff]
    %v91 = vld [vmem:[#allocation2 + $0x8] sm:$0xff]
    %v92 = vadd.f32 %v88, 0.0
    %v93 = vadd.f32 %v89, 0.0
    %v94 = vadd.f32 %v90, %v92
    %v95 = vadd.f32 %v91, %v93
    %96 = vst [vmem:[#allocation2] sm:$0xff] %v94
    %97 = vst [vmem:[#allocation2 + $0x8] sm:$0xff] %v95
    // Predicated region
    $region14: #{hint_loss.1} parent=1 // pred_check
      %p98 = pneg %p76
    $region15: #{hint_loss.1} parent=1 // pred_check_branch
      %100 = sbr.rel (%p98) target = $region17
    $region16: #{hint_loss.1} parent=1 // pred_region
      %v101 = vld [vmem:[#allocation2] sm:$0xff]
      %v102 = vld [vmem:[#allocation2 + $0x8] sm:$0xff]
      %v103 = vadd.f32 %v101, %v102
      %104 = vadd.xlane.f32.xlu0 %v103
      %v105 = vpop.xlane.xlu0 %104
      %v106 = vrot.slane %v105, 4
      %v107 = vadd.f32 %v105, %v106
      %v108 = vrot.slane %v107, 2
      %v109 = vadd.f32 %v107, %v108
      %v110 = vrot.slane %v109, 1
      %v111 = vadd.f32 %v109, %v110
      %s112 = vtos %v111
      %s113 = scalar_lea.smem [#allocation3], 0
      %114 = sst [smem:[%s113]] %s112
    $region17: #{hint_loss.1} parent=1 // pred_fallthru
      _
    // Predicated region
    $region18: #{hint_loss.1} parent=1 // pred_check
      _
    $region19: #{hint_loss.1} parent=1 // pred_check_branch
      %116 = sbr.rel (0) target = $region21
    $region20: #{hint_loss.1} parent=1 // pred_region
      %s118 = ssub.s32 16, 16
      %119 = vsyncadd [#allocation4], %s118
      %122 = dma.smem_to_hbm [#allocation3], 16, %s2, [#allocation4]
    $region21: #{hint_loss.1} parent=1 // pred_fallthru
      _
    // Predicated region
    $region22: #{hint_loss.1} parent=1 // pred_check
      _
    $region23: #{hint_loss.1} parent=1 // pred_check_branch
      %124 = sbr.rel (0) target = $region25
    $region24: #{hint_loss.1} parent=1 // pred_region
      %125 = dma.done [#allocation4], 16
    $region25: #{hint_loss.1} parent=1 // pred_fallthru
      _
    %126 = sfence
    %127 = vsyncpa [#allocation4], 1

</llo_original>
